<compile_context>
chip_gen: v5e
topology: v5e:2x2
jax: 0.10.0
libtpu: 0.0.40
codegen_flags: <defaults>
</compile_context>

<pallas_src>
import functools
import math

import jax
import jax.numpy as jnp
import numpy as np
from jax.experimental import pallas as pl
from jax.experimental.pallas import tpu as pltpu

# Finite large-negative bias (robust vs. -inf NaN propagation in the online
# softmax; exp(MASK_VALUE - real_max) underflows to exactly 0).
MASK_VALUE = -1e30


def _pick_tile(s, preferred, multiple):
    """Largest tile <= preferred that divides s and is a multiple of
    `multiple`; falls back to the full dimension (always legal)."""
    if s <= preferred:
        return s
    t = (preferred // multiple) * multiple
    while t >= multiple:
        if s % t == 0:
            return t
        t -= multiple
    return s


# ---------------------------------------------------------------------------
# Kernel 1: fused Q/K/V projections (scale folded into Q)
# ---------------------------------------------------------------------------
def _qkv_proj_kernel(x_ref, c_ref, wq_ref, wk_ref, wv_ref,
                     q_ref, k_ref, v_ref, *, scale):
    x = x_ref[...]                       # (ts, D)  native dtype
    c = c_ref[...]                       # (ts, D)
    # MXU matmuls in native dtype; f32 accumulation.
    q = jnp.dot(x, wq_ref[...], preferred_element_type=jnp.float32)
    k = jnp.dot(c, wk_ref[...], preferred_element_type=jnp.float32)
    v = jnp.dot(x, wv_ref[...], preferred_element_type=jnp.float32)
    # Fold the 1/sqrt(d_attn) softmax scale into q (cheap: O(S*A)).
    q_ref[...] = (q * scale).astype(q_ref.dtype)
    k_ref[...] = k.astype(k_ref.dtype)
    v_ref[...] = v.astype(v_ref.dtype)


# ---------------------------------------------------------------------------
# Kernel 2: flash attention (online softmax, never materializes (S,S))
# ---------------------------------------------------------------------------
def _flash_attn_kernel(q_ref, k_ref, v_ref, *rest,
                       causal, use_mask, tq, tk):
    if use_mask:
        mrow_ref, mcol_ref, o_ref, m_sc, l_sc, acc_sc = rest
    else:
        o_ref, m_sc, l_sc, acc_sc = rest

    qi = pl.program_id(1)
    ki = pl.program_id(2)

    @pl.when(ki == 0)
    def _init():
        m_sc[...] = jnp.full(m_sc.shape, MASK_VALUE, jnp.float32)
        l_sc[...] = jnp.zeros(l_sc.shape, jnp.float32)
        acc_sc[...] = jnp.zeros(acc_sc.shape, jnp.float32)

    def _update(apply_causal):
        q = q_ref[...]                   # (tq, A) native dtype, pre-scaled
        k = k_ref[...]                   # (tk, A)
        # s = q @ k.T  (contract feature dims; no explicit transpose)
        s = jax.lax.dot_general(
            q, k, (((1,), (1,)), ((), ())),
            preferred_element_type=jnp.float32)          # (tq, tk) f32

        if apply_causal or use_mask:
            # Narrow iotas; comparisons broadcast to (tq, tk) on the VPU.
            row = qi * tq + jax.lax.broadcasted_iota(jnp.int32, (tq, 1), 0)
            col = ki * tk + jax.lax.broadcasted_iota(jnp.int32, (1, tk), 1)
            keep = None
            if apply_causal:
                # torch.triu(ones, 1) == 0  <=>  col <= row
                keep = col <= row
            if use_mask:
                pad = jnp.logical_and(mrow_ref[...] > 0, mcol_ref[...] > 0)
                pad = jnp.logical_or(pad, row == col)    # "+ eye" keeps diag
                keep = pad if keep is None else jnp.logical_and(keep, pad)
            s = jnp.where(keep, s, MASK_VALUE)

        # Online softmax update.
        m_prev = m_sc[...]                               # (tq, 1)
        m_new = jnp.maximum(m_prev, jnp.max(s, axis=-1, keepdims=True))
        alpha = jnp.exp(m_prev - m_new)
        p = jnp.exp(s - m_new)                           # (tq, tk)
        l_sc[...] = alpha * l_sc[...] + jnp.sum(p, axis=-1, keepdims=True)
        acc_sc[...] = alpha * acc_sc[...] + jnp.dot(
            p.astype(v_ref.dtype), v_ref[...],
            preferred_element_type=jnp.float32)
        m_sc[...] = m_new

    if causal:
        q_lo = qi * tq
        q_hi = qi * tq + (tq - 1)
        k_lo = ki * tk
        k_hi = ki * tk + (tk - 1)

        # Interior (fully visible) tiles: no causal where/iota work needed.
        @pl.when(k_hi <= q_lo)
        def _interior():
            _update(apply_causal=False)

        # Diagonal band tiles: apply the causal mask.
        @pl.when(jnp.logical_and(k_lo <= q_hi, k_hi > q_lo))
        def _band():
            _update(apply_causal=True)

        # Fully-masked future tiles (k_lo > q_hi): skipped entirely.
    else:
        _update(apply_causal=False)

    @pl.when(ki == pl.num_programs(2) - 1)
    def _finalize():
        # Deferred normalization: one O(tq*D) multiply + EUP reciprocal.
        inv_l = pl.reciprocal(l_sc[...], approx=True)
        o_ref[...] = (acc_sc[...] * inv_l).astype(o_ref.dtype)


# ---------------------------------------------------------------------------
# Wrapper
# ---------------------------------------------------------------------------
def attention_forward(x, wq, wk, wv, *, d_attn, cross=None, mask=None,
                      cross_attention=False, block_q=512, block_k=512):
    """Pallas equivalent of Attention.forward.

    x:     (B, S, d_model)
    wq/wk: (d_model, d_attn)   (PyTorch linear weight, pre-transposed)
    wv:    (d_model, d_model)
    mask:  optional (B, S) {0,1} padding mask
    """
    B, S, D = x.shape
    A = wq.shape[1]
    if cross is None:
        cross = x
    use_mask = mask is not None
    scale = 1.0 / math.sqrt(d_attn)

    cparams = dict(vmem_limit_bytes=48 * 1024 * 1024)

    # ---- Kernel 1: Q/K/V projections ------------------------------------
    # TODO(synk): for very large d_model the (D, D) Wv block should be tiled
    # along its contraction dim; full-weight blocks are fine at these sizes.
    ts = _pick_tile(S, 512, 8)
    q, k, v = pl.pallas_call(
        functools.partial(_qkv_proj_kernel, scale=scale),
        grid=(B, S // ts),
        in_specs=[
            pl.BlockSpec((None, ts, D), lambda b, i: (b, i, 0)),   # x
            pl.BlockSpec((None, ts, D), lambda b, i: (b, i, 0)),   # cross
            pl.BlockSpec((D, A), lambda b, i: (0, 0)),             # Wq
            pl.BlockSpec((D, A), lambda b, i: (0, 0)),             # Wk
            pl.BlockSpec((D, D), lambda b, i: (0, 0)),             # Wv
        ],
        out_specs=[
            pl.BlockSpec((None, ts, A), lambda b, i: (b, i, 0)),
            pl.BlockSpec((None, ts, A), lambda b, i: (b, i, 0)),
            pl.BlockSpec((None, ts, D), lambda b, i: (b, i, 0)),
        ],
        out_shape=[
            jax.ShapeDtypeStruct((B, S, A), x.dtype),
            jax.ShapeDtypeStruct((B, S, A), x.dtype),
            jax.ShapeDtypeStruct((B, S, D), x.dtype),
        ],
        compiler_params=pltpu.CompilerParams(
            dimension_semantics=("parallel", "parallel"), **cparams),
    )(x, cross, wq, wk, wv)

    # ---- Kernel 2: flash attention ---------------------------------------
    tq = _pick_tile(S, block_q, 8)
    # col-mask tile rides the lane dim -> keep it 128-aligned when masking.
    tk = _pick_tile(S, block_k, 128 if use_mask else 8)
    nq, nk = S // tq, S // tk

    in_specs = [
        pl.BlockSpec((None, tq, A), lambda b, qi, ki: (b, qi, 0)),   # q
        pl.BlockSpec((None, tk, A), lambda b, qi, ki: (b, ki, 0)),   # k
        pl.BlockSpec((None, tk, D), lambda b, qi, ki: (b, ki, 0)),   # v
    ]
    args = [q, k, v]
    if use_mask:
        # Two host-side layouts of the same mask: sublane-oriented row mask
        # and lane-oriented col mask (avoids any in-kernel transpose).
        mask_rows = mask.astype(jnp.float32).reshape(B, S, 1)
        mask_cols = mask.astype(jnp.float32).reshape(B, 1, S)
        in_specs += [
            pl.BlockSpec((None, tq, 1), lambda b, qi, ki: (b, qi, 0)),
            pl.BlockSpec((None, 1, tk), lambda b, qi, ki: (b, 0, ki)),
        ]
        args += [mask_rows, mask_cols]

    kernel = functools.partial(_flash_attn_kernel, causal=cross_attention,
                               use_mask=use_mask, tq=tq, tk=tk)

    return pl.pallas_call(
        kernel,
        grid=(B, nq, nk),
        in_specs=in_specs,
        out_specs=pl.BlockSpec((None, tq, D), lambda b, qi, ki: (b, qi, 0)),
        out_shape=jax.ShapeDtypeStruct((B, S, D), x.dtype),
        scratch_shapes=[
            pltpu.VMEM((tq, 1), jnp.float32),   # running max   m
            pltpu.VMEM((tq, 1), jnp.float32),   # running denom l
            pltpu.VMEM((tq, D), jnp.float32),   # running numerator acc
        ],
        compiler_params=pltpu.CompilerParams(
            dimension_semantics=("parallel", "parallel", "arbitrary"),
            **cparams),
    )(*args)


# ---------------------------------------------------------------------------
# Pure-JAX reference matching the PyTorch semantics exactly
# ---------------------------------------------------------------------------
def attention_ref(x, wq, wk, wv, *, d_attn, cross=None, mask=None,
                  cross_attention=False):
    if cross is None:
        cross = x
    q = x @ wq
    k = cross @ wk
    v = x @ wv
    logits = q @ jnp.swapaxes(k, -1, -2)
    if cross_attention:
        S = logits.shape[-1]
        row = jnp.arange(S)[:, None]
        col = jnp.arange(S)[None, :]
        logits = jnp.where(col <= row, logits, -jnp.inf)
    if mask is not None:
        sm = mask.astype(jnp.float32)
        square = sm[..., :, None] * sm[..., None, :]
        square = square + jnp.eye(mask.shape[1], dtype=jnp.float32)[None]
        logits = jnp.where(square > 0, logits, -jnp.inf)
    attn = jax.nn.softmax(logits / (d_attn ** 0.5), axis=-1)
    return attn @ v


if __name__ == "__main__":
    # Lane-dense, multi-tile shapes (still small): exercises the full flash
    # path with a (2, 2, 2) grid when block_q = block_k = 128.
    B, S, d_model, d_attn = 2, 256, 128, 128

    key = jax.random.PRNGKey(0)
    kx, kq, kk, kv = jax.random.split(key, 4)

    x = jax.random.normal(kx, (B, S, d_model), jnp.float32)
    bound = 1.0 / math.sqrt(d_model)
    wq = jax.random.uniform(kq, (d_model, d_attn), jnp.float32, -bound, bound)
    wk = jax.random.uniform(kk, (d_model, d_attn), jnp.float32, -bound, bound)
    wv = jax.random.uniform(kv, (d_model, d_model), jnp.float32, -bound, bound)

    # padding mask: 200 valid tokens in batch 0, 96 in batch 1
    lengths = jnp.array([200, 96], jnp.int32)
    mask = (jnp.arange(S)[None, :] < lengths[:, None]).astype(jnp.float32)

    # Config 1: self-attention with padding mask
    out1 = attention_forward(x, wq, wk, wv, d_attn=d_attn, mask=mask,
                             cross_attention=False, block_q=128, block_k=128)
    jax.block_until_ready(out1)
    ref1 = attention_ref(x, wq, wk, wv, d_attn=d_attn, mask=mask,
                         cross_attention=False)
    assert out1.shape == x.shape
    np.testing.assert_allclose(np.asarray(out1), np.asarray(ref1),
                               rtol=2e-2, atol=2e-2)

    # Config 2: "cross_attention" (causal) path, no padding mask
    out2 = attention_forward(x, wq, wk, wv, d_attn=d_attn,
                             cross_attention=True, block_q=128, block_k=128)
    jax.block_until_ready(out2)
    ref2 = attention_ref(x, wq, wk, wv, d_attn=d_attn, cross_attention=True)
    assert out2.shape == x.shape
    np.testing.assert_allclose(np.asarray(out2), np.asarray(ref2),
                               rtol=2e-2, atol=2e-2)

    # Config 3: causal + padding mask together
    out3 = attention_forward(x, wq, wk, wv, d_attn=d_attn, mask=mask,
                             cross_attention=True, block_q=128, block_k=128)
    jax.block_until_ready(out3)
    ref3 = attention_ref(x, wq, wk, wv, d_attn=d_attn, mask=mask,
                         cross_attention=True)
    np.testing.assert_allclose(np.asarray(out3), np.asarray(ref3),
                               rtol=2e-2, atol=2e-2)

    # Config 4: bf16 operands (native MXU dtype) — smoke test
    out4 = attention_forward(x.astype(jnp.bfloat16),
                             wq.astype(jnp.bfloat16),
                             wk.astype(jnp.bfloat16),
                             wv.astype(jnp.bfloat16),
                             d_attn=d_attn, mask=mask,
                             cross_attention=False,
                             block_q=128, block_k=128)
    jax.block_until_ready(out4)
    assert out4.shape == x.shape and out4.dtype == jnp.bfloat16
    assert bool(jnp.all(jnp.isfinite(out4.astype(jnp.float32))))

    print("KERNEL_OK")
</pallas_src>

<mosaic_0001>
module attributes {stable_mosaic.version = 11 : i64} {
  func.func @_qkv_proj_kernel(%arg0: i32, %arg1: i32, %arg2: memref<1x256x128xf32, #tpu.memory_space<vmem>>, %arg3: memref<1x256x128xf32, #tpu.memory_space<vmem>>, %arg4: memref<128x128xf32, #tpu.memory_space<vmem>>, %arg5: memref<128x128xf32, #tpu.memory_space<vmem>>, %arg6: memref<128x128xf32, #tpu.memory_space<vmem>>, %arg7: memref<1x256x128xf32, #tpu.memory_space<vmem>>, %arg8: memref<1x256x128xf32, #tpu.memory_space<vmem>>, %arg9: memref<1x256x128xf32, #tpu.memory_space<vmem>>) attributes {dimension_semantics = [#tpu.dimension_semantics<parallel>, #tpu.dimension_semantics<parallel>], iteration_bounds = array<i64: 2, 1>, scalar_prefetch = 0 : i64, scratch_operands = 0 : i64, tpu.core_type = #tpu.core_type<tc>, window_params = [{transform_indices = @transform_0, window_bounds = array<i64: 1, 256, 128>}, {transform_indices = @transform_1, window_bounds = array<i64: 1, 256, 128>}, {pipeline_mode = #tpu.pipeline_mode<synchronous>, transform_indices = @transform_2, window_bounds = array<i64: 128, 128>}, {pipeline_mode = #tpu.pipeline_mode<synchronous>, transform_indices = @transform_3, window_bounds = array<i64: 128, 128>}, {pipeline_mode = #tpu.pipeline_mode<synchronous>, transform_indices = @transform_4, window_bounds = array<i64: 128, 128>}, {transform_indices = @transform_5, window_bounds = array<i64: 1, 256, 128>}, {transform_indices = @transform_6, window_bounds = array<i64: 1, 256, 128>}, {transform_indices = @transform_7, window_bounds = array<i64: 1, 256, 128>}]} {
    %c0 = arith.constant 0 : index
    %c0_0 = arith.constant 0 : index
    %c0_1 = arith.constant 0 : index
    %0 = vector.load %arg2[%c0, %c0_0, %c0_1] : memref<1x256x128xf32, #tpu.memory_space<vmem>>, vector<1x256x128xf32>
    %1 = vector.shape_cast %0 : vector<1x256x128xf32> to vector<256x128xf32>
    %c0_2 = arith.constant 0 : index
    %c0_3 = arith.constant 0 : index
    %c0_4 = arith.constant 0 : index
    %2 = vector.load %arg3[%c0_2, %c0_3, %c0_4] : memref<1x256x128xf32, #tpu.memory_space<vmem>>, vector<1x256x128xf32>
    %3 = vector.shape_cast %2 : vector<1x256x128xf32> to vector<256x128xf32>
    %c0_5 = arith.constant 0 : index
    %c0_6 = arith.constant 0 : index
    %4 = vector.load %arg4[%c0_5, %c0_6] : memref<128x128xf32, #tpu.memory_space<vmem>>, vector<128x128xf32>
    %cst = arith.constant dense<0.000000e+00> : vector<256x128xf32>
    %5 = tpu.matmul %1, %4, %cst {dimension_numbers = #tpu.dot_dimension_numbers<[1], [0], [0], [1], [0, 0, 1, 1], [], []>} : vector<256x128xf32>, vector<128x128xf32>, vector<256x128xf32> -> vector<256x128xf32>
    %c0_7 = arith.constant 0 : index
    %c0_8 = arith.constant 0 : index
    %6 = vector.load %arg5[%c0_7, %c0_8] : memref<128x128xf32, #tpu.memory_space<vmem>>, vector<128x128xf32>
    %cst_9 = arith.constant dense<0.000000e+00> : vector<256x128xf32>
    %7 = tpu.matmul %3, %6, %cst_9 {dimension_numbers = #tpu.dot_dimension_numbers<[1], [0], [0], [1], [0, 0, 1, 1], [], []>} : vector<256x128xf32>, vector<128x128xf32>, vector<256x128xf32> -> vector<256x128xf32>
    %c0_10 = arith.constant 0 : index
    %c0_11 = arith.constant 0 : index
    %8 = vector.load %arg6[%c0_10, %c0_11] : memref<128x128xf32, #tpu.memory_space<vmem>>, vector<128x128xf32>
    %cst_12 = arith.constant dense<0.000000e+00> : vector<256x128xf32>
    %9 = tpu.matmul %1, %8, %cst_12 {dimension_numbers = #tpu.dot_dimension_numbers<[1], [0], [0], [1], [0, 0, 1, 1], [], []>} : vector<256x128xf32>, vector<128x128xf32>, vector<256x128xf32> -> vector<256x128xf32>
    %cst_13 = arith.constant 0.0883883461 : f32
    %10 = vector.broadcast %cst_13 : f32 to vector<256x128xf32>
    %11 = arith.mulf %5, %10 : vector<256x128xf32>
    %c0_14 = arith.constant 0 : index
    %c0_15 = arith.constant 0 : index
    %c0_16 = arith.constant 0 : index
    %12 = vector.load %arg7[%c0_14, %c0_15, %c0_16] : memref<1x256x128xf32, #tpu.memory_space<vmem>>, vector<1x256x128xf32>
    %13 = vector.shape_cast %12 : vector<1x256x128xf32> to vector<256x128xf32>
    %14 = vector.shape_cast %11 : vector<256x128xf32> to vector<1x256x128xf32>
    tpu.vector_store %arg7[%c0_14, %c0_15, %c0_16], %14 {strides = array<i32>} : memref<1x256x128xf32, #tpu.memory_space<vmem>>, vector<1x256x128xf32>,
    %c0_17 = arith.constant 0 : index
    %c0_18 = arith.constant 0 : index
    %c0_19 = arith.constant 0 : index
    %15 = vector.load %arg8[%c0_17, %c0_18, %c0_19] : memref<1x256x128xf32, #tpu.memory_space<vmem>>, vector<1x256x128xf32>
    %16 = vector.shape_cast %15 : vector<1x256x128xf32> to vector<256x128xf32>
    %17 = vector.shape_cast %7 : vector<256x128xf32> to vector<1x256x128xf32>
    tpu.vector_store %arg8[%c0_17, %c0_18, %c0_19], %17 {strides = array<i32>} : memref<1x256x128xf32, #tpu.memory_space<vmem>>, vector<1x256x128xf32>,
    %c0_20 = arith.constant 0 : index
    %c0_21 = arith.constant 0 : index
    %c0_22 = arith.constant 0 : index
    %18 = vector.load %arg9[%c0_20, %c0_21, %c0_22] : memref<1x256x128xf32, #tpu.memory_space<vmem>>, vector<1x256x128xf32>
    %19 = vector.shape_cast %18 : vector<1x256x128xf32> to vector<256x128xf32>
    %20 = vector.shape_cast %9 : vector<256x128xf32> to vector<1x256x128xf32>
    tpu.vector_store %arg9[%c0_20, %c0_21, %c0_22], %20 {strides = array<i32>} : memref<1x256x128xf32, #tpu.memory_space<vmem>>, vector<1x256x128xf32>,
    return
  }
  func.func @transform_0(%arg0: i32, %arg1: i32) -> (i32, i32, i32) {
    %c0_i32 = arith.constant 0 : i32
    %c0_i32_0 = arith.constant 0 : i32
    return %arg0, %arg1, %c0_i32 : i32, i32, i32
  }
  func.func @transform_1(%arg0: i32, %arg1: i32) -> (i32, i32, i32) {
    %c0_i32 = arith.constant 0 : i32
    %c0_i32_0 = arith.constant 0 : i32
    return %arg0, %arg1, %c0_i32 : i32, i32, i32
  }
  func.func @transform_2(%arg0: i32, %arg1: i32) -> (i32, i32) {
    %c0_i32 = arith.constant 0 : i32
    %c0_i32_0 = arith.constant 0 : i32
    %c0_i32_1 = arith.constant 0 : i32
    return %c0_i32, %c0_i32_0 : i32, i32
  }
  func.func @transform_3(%arg0: i32, %arg1: i32) -> (i32, i32) {
    %c0_i32 = arith.constant 0 : i32
    %c0_i32_0 = arith.constant 0 : i32
    %c0_i32_1 = arith.constant 0 : i32
    return %c0_i32, %c0_i32_0 : i32, i32
  }
  func.func @transform_4(%arg0: i32, %arg1: i32) -> (i32, i32) {
    %c0_i32 = arith.constant 0 : i32
    %c0_i32_0 = arith.constant 0 : i32
    %c0_i32_1 = arith.constant 0 : i32
    return %c0_i32, %c0_i32_0 : i32, i32
  }
  func.func @transform_5(%arg0: i32, %arg1: i32) -> (i32, i32, i32) {
    %c0_i32 = arith.constant 0 : i32
    %c0_i32_0 = arith.constant 0 : i32
    return %arg0, %arg1, %c0_i32 : i32, i32, i32
  }
  func.func @transform_6(%arg0: i32, %arg1: i32) -> (i32, i32, i32) {
    %c0_i32 = arith.constant 0 : i32
    %c0_i32_0 = arith.constant 0 : i32
    return %arg0, %arg1, %c0_i32 : i32, i32, i32
  }
  func.func @transform_7(%arg0: i32, %arg1: i32) -> (i32, i32, i32) {
    %c0_i32 = arith.constant 0 : i32
    %c0_i32_0 = arith.constant 0 : i32
    return %arg0, %arg1, %c0_i32 : i32, i32, i32
  }
}

</mosaic_0001>

<llo_original>
// kernel: tpu_custom_call.1
$region0: #{tpu_custom_call.1}
  #allocation0 [shape = 'u32[]', space=smem, size = 0x4, offset = 0x4, fixed_abs, tag = 'smem constant byte address 0x4 - core index']
  #allocation1 [shape = 'u32[72,128]{1,0:T(1,128)}', space=vmem, size = 0x9000, scoped, tag = 'internal scratch']
  %s0 = inlined_call_operand.hbm [shape: f32[2,256,128], index: 0, kind: input, shape index: {}]
  %s1 = inlined_call_operand.hbm [shape: f32[2,256,128], index: 1, kind: input, shape index: {}]
  %s2 = inlined_call_operand.hbm [shape: f32[128,128], index: 2, kind: input, shape index: {}]
  %s3 = inlined_call_operand.hbm [shape: f32[128,128], index: 3, kind: input, shape index: {}]
  %s4 = inlined_call_operand.hbm [shape: f32[128,128], index: 4, kind: input, shape index: {}]
  %s5 = inlined_call_operand.hbm [shape: f32[2,256,128], index: 5, kind: output, shape index: {0}]
  %s6 = inlined_call_operand.hbm [shape: f32[2,256,128], index: 6, kind: output, shape index: {1}]
  %s7 = inlined_call_operand.hbm [shape: f32[2,256,128], index: 7, kind: output, shape index: {2}]
  %8 = xla_tuple %s5, %s6, %s7
  %s9 = sld [smem:[#allocation0]]
  $region89: #{tpu_custom_call.1} parent=0
    _
  %s11 = ssub.s32 1, %s9
  %s12 = scalar_select 0, %s11, %s9
  $region1: #{tpu_custom_call.1} parent=0
    #allocation2 [shape = 'u8[262144]{0}', space=vmem, size = 0x40000, scoped, tag = 'input window, operand 0']
    #allocation3 [shape = 's32[2]{0}', space=sflag, size = 0x8, scoped, tag = 'scoped memory for tpu_custom_call.1']
    #allocation4 [shape = 's32[2]{0}', space=sflag, size = 0x8, scoped, tag = 'scoped memory for tpu_custom_call.1']
    #allocation5 [shape = 'u8[262144]{0}', space=vmem, size = 0x40000, scoped, tag = 'input window, operand 1']
    #allocation6 [shape = 's32[2]{0}', space=sflag, size = 0x8, scoped, tag = 'scoped memory for tpu_custom_call.1']
    #allocation7 [shape = 'u8[65536]{0}', space=vmem, size = 0x10000, scoped, tag = 'input window, operand 2, single buffered']
    #allocation8 [shape = 'u8[65536]{0}', space=vmem, size = 0x10000, scoped, tag = 'input window, operand 3, single buffered']
    #allocation9 [shape = 's32[1]{0}', space=sflag, size = 0x4, scoped, tag = 'scoped memory for tpu_custom_call.1']
    #allocation10 [shape = 'u8[65536]{0}', space=vmem, size = 0x10000, scoped, tag = 'input window, operand 4, single buffered']
    #allocation11 [shape = 'u8[262144]{0}', space=vmem, size = 0x40000, scoped, tag = 'output window, operand 0']
    #allocation12 [shape = 'u8[262144]{0}', space=vmem, size = 0x40000, scoped, tag = 'output window, operand 1']
    #allocation13 [shape = 's32[2]{0}', space=sflag, size = 0x8, scoped, tag = 'scoped memory for tpu_custom_call.1']
    #allocation14 [shape = 'u8[262144]{0}', space=vmem, size = 0x40000, scoped, tag = 'output window, operand 2']
    %13 = vsyncpa [#allocation3], 0
    %s14 = scalar_lea.sflag [#allocation3], 1
    %15 = vsyncpa %s14, 0
    %16 = vsyncpa [#allocation6], 0
    %s17 = scalar_lea.sflag [#allocation6], 1
    %18 = vsyncpa %s17, 0
    %19 = vsyncpa [#allocation9], 0
    %20 = vsyncpa [#allocation4], 0
    %s21 = scalar_lea.sflag [#allocation4], 1
    %22 = vsyncpa %s21, 0
    %23 = vsyncpa [#allocation13], 0
    %s24 = scalar_lea.sflag [#allocation13], 1
    %25 = vsyncpa %s24, 0
    loop: start=0, step=1, limit=4
    $region2: #{tpu_custom_call.1} parent=1 // loop_pre_header
      _
    $region3: #{tpu_custom_call.1} parent=1 // loop_header
      %s27 = sphi 0, %s31
      %p28 = scmp.ge.s32.totalorder %s27, 4
      %s34 = sphi 0, %s46
      %s35 = sphi 0, %s42
      %s36 = sphi 0, %s34
      %s37 = sphi 0, %s35
      %s38 = sphi 0, %s36
      %s39 = sphi 0, %s37
      %s51 = sphi 0, %s53
      %s54 = sphi 0, %s51
      %s55 = sphi 0, %s54
      %s71 = sphi 0, %s55
      %s79 = sphi 0, %s81
      %s82 = sphi 0, %s79
      %s83 = sphi 0, %s82
      %s99 = sphi 0, %s83
      %s103 = sphi 0, %s103
      %s105 = sphi 0, %s103
      %s106 = sphi 0, %s105
      %s120 = sphi 0, %s106
      %s124 = sphi 0, %s124
      %s126 = sphi 0, %s124
      %s127 = sphi 0, %s126
      %s141 = sphi 0, %s127
      %s145 = sphi 0, %s145
      %s147 = sphi 0, %s145
      %s148 = sphi 0, %s147
      %s162 = sphi 0, %s148
      %s170 = sphi 0, %s172
      %s173 = sphi 0, %s170
      %s174 = sphi 0, %s173
      %s190 = sphi 0, %s174
      %s198 = sphi 0, %s200
      %s201 = sphi 0, %s198
      %s202 = sphi 0, %s201
      %s218 = sphi 0, %s202
      %s226 = sphi 0, %s228
      %s229 = sphi 0, %s226
      %s230 = sphi 0, %s229
      %s246 = sphi 0, %s230
    $region4: #{tpu_custom_call.1} parent=1 // loop_header_branch
      %30 = sbr.rel (%p28) target = $region8
    $region5: #{tpu_custom_call.1} parent=1 // loop_body
      %s32 = ssub.s32 %s27, 1
      %s33 = ssub.s32 %s27, 2
      %s40 = sadd.s32 1, %s35
      %p41 = scmp.ge.s32.totalorder %s40, 1
      %s42 = scalar_select %p41, 0, %s40
      %s43 = sadd.s32 1, %s34
      %s44 = scalar_select %p41, %s43, %s34
      %p45 = scmp.ge.s32.totalorder %s44, 2
      %s46 = scalar_select %p45, 0, %s44
      %s47 = ssub.s32 %s34, %s46
      %s48 = ssub.s32 %s35, %s42
      %s49 = sor.u32 %s47, %s48
      %p50 = scmp.eq.s32.totalorder %s49, 0
      %s52 = sadd.s32 %s51, 1
      %s53 = scalar_select %p50, %s51, %s52
      %p56 = pneg %p50
      %p57 = scmp.eq.s32.totalorder %s27, 1
      %p58 = por %p56, %p57
      %p59 = scmp.ne.s32.totalorder %s51, %s54
      %p60 = scmp.eq.s32.totalorder %s27, 0
      %p61 = por %p59, %p60
      %p62 = scmp.ne.s32.totalorder %s51, %s54
      %p63 = scmp.eq.s32.totalorder %s32, 1
      %p64 = por %p62, %p63
      %p65 = scmp.ne.s32.totalorder %s54, %s55
      %p66 = scmp.eq.s32.totalorder %s32, 0
      %p67 = por %p65, %p66
      %p68 = scmp.ne.s32.totalorder %s54, %s55
      %p69 = scmp.eq.s32.totalorder %s33, 1
      %p70 = por %p68, %p69
      %p72 = scmp.ne.s32.totalorder %s55, %s71
      %p73 = scmp.eq.s32.totalorder %s33, 0
      %p74 = por %p72, %p73
      %s75 = ssub.s32 %s34, %s46
      %s76 = ssub.s32 %s35, %s42
      %s77 = sor.u32 %s75, %s76
      %p78 = scmp.eq.s32.totalorder %s77, 0
      %s80 = sadd.s32 %s79, 1
      %s81 = scalar_select %p78, %s79, %s80
      %p84 = pneg %p78
      %p85 = scmp.eq.s32.totalorder %s27, 1
      %p86 = por %p84, %p85
      %p87 = scmp.ne.s32.totalorder %s79, %s82
      %p88 = scmp.eq.s32.totalorder %s27, 0
      %p89 = por %p87, %p88
      %p90 = scmp.ne.s32.totalorder %s79, %s82
      %p91 = scmp.eq.s32.totalorder %s32, 1
      %p92 = por %p90, %p91
      %p93 = scmp.ne.s32.totalorder %s82, %s83
      %p94 = scmp.eq.s32.totalorder %s32, 0
      %p95 = por %p93, %p94
      %p96 = scmp.ne.s32.totalorder %s82, %s83
      %p97 = scmp.eq.s32.totalorder %s33, 1
      %p98 = por %p96, %p97
      %p100 = scmp.ne.s32.totalorder %s83, %s99
      %p101 = scmp.eq.s32.totalorder %s33, 0
      %p102 = por %p100, %p101
      %s104 = sadd.s32 %s103, 1
      %p107 = scmp.eq.s32.totalorder %s27, 1
      %p108 = scmp.ne.s32.totalorder %s103, %s105
      %p109 = scmp.eq.s32.totalorder %s27, 0
      %p110 = por %p108, %p109
      %p111 = scmp.ne.s32.totalorder %s103, %s105
      %p112 = scmp.eq.s32.totalorder %s32, 1
      %p113 = por %p111, %p112
      %p114 = scmp.ne.s32.totalorder %s105, %s106
      %p115 = scmp.eq.s32.totalorder %s32, 0
      %p116 = por %p114, %p115
      %p117 = scmp.ne.s32.totalorder %s105, %s106
      %p118 = scmp.eq.s32.totalorder %s33, 1
      %p119 = por %p117, %p118
      %p121 = scmp.ne.s32.totalorder %s106, %s120
      %p122 = scmp.eq.s32.totalorder %s33, 0
      %p123 = por %p121, %p122
      %s125 = sadd.s32 %s124, 1
      %p128 = scmp.eq.s32.totalorder %s27, 1
      %p129 = scmp.ne.s32.totalorder %s124, %s126
      %p130 = scmp.eq.s32.totalorder %s27, 0
      %p131 = por %p129, %p130
      %p132 = scmp.ne.s32.totalorder %s124, %s126
      %p133 = scmp.eq.s32.totalorder %s32, 1
      %p134 = por %p132, %p133
      %p135 = scmp.ne.s32.totalorder %s126, %s127
      %p136 = scmp.eq.s32.totalorder %s32, 0
      %p137 = por %p135, %p136
      %p138 = scmp.ne.s32.totalorder %s126, %s127
      %p139 = scmp.eq.s32.totalorder %s33, 1
      %p140 = por %p138, %p139
      %p142 = scmp.ne.s32.totalorder %s127, %s141
      %p143 = scmp.eq.s32.totalorder %s33, 0
      %p144 = por %p142, %p143
      %s146 = sadd.s32 %s145, 1
      %p149 = scmp.eq.s32.totalorder %s27, 1
      %p150 = scmp.ne.s32.totalorder %s145, %s147
      %p151 = scmp.eq.s32.totalorder %s27, 0
      %p152 = por %p150, %p151
      %p153 = scmp.ne.s32.totalorder %s145, %s147
      %p154 = scmp.eq.s32.totalorder %s32, 1
      %p155 = por %p153, %p154
      %p156 = scmp.ne.s32.totalorder %s147, %s148
      %p157 = scmp.eq.s32.totalorder %s32, 0
      %p158 = por %p156, %p157
      %p159 = scmp.ne.s32.totalorder %s147, %s148
      %p160 = scmp.eq.s32.totalorder %s33, 1
      %p161 = por %p159, %p160
      %p163 = scmp.ne.s32.totalorder %s148, %s162
      %p164 = scmp.eq.s32.totalorder %s33, 0
      %p165 = por %p163, %p164
      %s166 = ssub.s32 %s34, %s46
      %s167 = ssub.s32 %s35, %s42
      %s168 = sor.u32 %s166, %s167
      %p169 = scmp.eq.s32.totalorder %s168, 0
      %s171 = sadd.s32 %s170, 1
      %s172 = scalar_select %p169, %s170, %s171
      %p175 = pneg %p169
      %p176 = scmp.eq.s32.totalorder %s27, 1
      %p177 = por %p175, %p176
      %p178 = scmp.ne.s32.totalorder %s170, %s173
      %p179 = scmp.eq.s32.totalorder %s27, 0
      %p180 = por %p178, %p179
      %p181 = scmp.ne.s32.totalorder %s170, %s173
      %p182 = scmp.eq.s32.totalorder %s32, 1
      %p183 = por %p181, %p182
      %p184 = scmp.ne.s32.totalorder %s173, %s174
      %p185 = scmp.eq.s32.totalorder %s32, 0
      %p186 = por %p184, %p185
      %p187 = scmp.ne.s32.totalorder %s173, %s174
      %p188 = scmp.eq.s32.totalorder %s33, 1
      %p189 = por %p187, %p188
      %p191 = scmp.ne.s32.totalorder %s174, %s190
      %p192 = scmp.eq.s32.totalorder %s33, 0
      %p193 = por %p191, %p192
      %s194 = ssub.s32 %s34, %s46
      %s195 = ssub.s32 %s35, %s42
      %s196 = sor.u32 %s194, %s195
      %p197 = scmp.eq.s32.totalorder %s196, 0
      %s199 = sadd.s32 %s198, 1
      %s200 = scalar_select %p197, %s198, %s199
      %p203 = pneg %p197
      %p204 = scmp.eq.s32.totalorder %s27, 1
      %p205 = por %p203, %p204
      %p206 = scmp.ne.s32.totalorder %s198, %s201
      %p207 = scmp.eq.s32.totalorder %s27, 0
      %p208 = por %p206, %p207
      %p209 = scmp.ne.s32.totalorder %s198, %s201
      %p210 = scmp.eq.s32.totalorder %s32, 1
      %p211 = por %p209, %p210
      %p212 = scmp.ne.s32.totalorder %s201, %s202
      %p213 = scmp.eq.s32.totalorder %s32, 0
      %p214 = por %p212, %p213
      %p215 = scmp.ne.s32.totalorder %s201, %s202
      %p216 = scmp.eq.s32.totalorder %s33, 1
      %p217 = por %p215, %p216
      %p219 = scmp.ne.s32.totalorder %s202, %s218
      %p220 = scmp.eq.s32.totalorder %s33, 0
      %p221 = por %p219, %p220
      %s222 = ssub.s32 %s34, %s46
      %s223 = ssub.s32 %s35, %s42
      %s224 = sor.u32 %s222, %s223
      %p225 = scmp.eq.s32.totalorder %s224, 0
      %s227 = sadd.s32 %s226, 1
      %s228 = scalar_select %p225, %s226, %s227
      %p231 = pneg %p225
      %p232 = scmp.eq.s32.totalorder %s27, 1
      %p233 = por %p231, %p232
      %p234 = scmp.ne.s32.totalorder %s226, %s229
      %p235 = scmp.eq.s32.totalorder %s27, 0
      %p236 = por %p234, %p235
      %p237 = scmp.ne.s32.totalorder %s226, %s229
      %p238 = scmp.eq.s32.totalorder %s32, 1
      %p239 = por %p237, %p238
      %p240 = scmp.ne.s32.totalorder %s229, %s230
      %p241 = scmp.eq.s32.totalorder %s32, 0
      %p242 = por %p240, %p241
      %p243 = scmp.ne.s32.totalorder %s229, %s230
      %p244 = scmp.eq.s32.totalorder %s33, 1
      %p245 = por %p243, %p244
      %p247 = scmp.ne.s32.totalorder %s230, %s246
      %p248 = scmp.eq.s32.totalorder %s33, 0
      %p249 = por %p247, %p248
      %p250 = scmp.le.s32.totalorder 1, %s27
      %p251 = scmp.lt.s32.totalorder %s27, 3
      %p252 = pnand %p250, %p251
      %p253 = pneg %p252
      // Predicated region
      $region9: #{tpu_custom_call.1} parent=5 // pred_check
        _
      $region10: #{tpu_custom_call.1} parent=5 // pred_check_branch
        %255 = sbr.rel (%p252) target = $region12
      $region11: #{tpu_custom_call.1} parent=5 // pred_region
        %s256 = ssub.s32 %s27, 1
        // Predicated region
        $region13: #{tpu_custom_call.1} parent=11 // pred_check
          %p257 = pneg %p116
        $region14: #{tpu_custom_call.1} parent=11 // pred_check_branch
          %259 = sbr.rel (%p257) target = $region16
        $region15: #{tpu_custom_call.1} parent=11 // pred_region
          %261 = vsyncadd [#allocation6], 0
          %s262 = sshll.u32 %s2, 4
          %s263 = int_to_ptr.hbm [resolvable:$true] %s262
          %s264 = sshll.u32 [#allocation7], 4
          %s265 = int_to_ptr.vmem [resolvable:$true] %s264
          %270 = dma.hbm_to_vmem [thread:$0]  %s263, 2048, %s265, [#allocation6], 128, 128, 8
        $region16: #{tpu_custom_call.1} parent=11 // pred_fallthru
          _
        // Predicated region
        $region17: #{tpu_custom_call.1} parent=11 // pred_check
          %p271 = pneg %p137
        $region18: #{tpu_custom_call.1} parent=11 // pred_check_branch
          %273 = sbr.rel (%p271) target = $region20
        $region19: #{tpu_custom_call.1} parent=11 // pred_region
          %275 = vsyncadd [#allocation9], 0
          %s276 = sshll.u32 %s3, 4
          %s277 = int_to_ptr.hbm [resolvable:$true] %s276
          %s278 = sshll.u32 [#allocation8], 4
          %s279 = int_to_ptr.vmem [resolvable:$true] %s278
          %284 = dma.hbm_to_vmem [thread:$0]  %s277, 2048, %s279, [#allocation9], 128, 128, 8
        $region20: #{tpu_custom_call.1} parent=11 // pred_fallthru
          _
        // Predicated region
        $region21: #{tpu_custom_call.1} parent=11 // pred_check
          %p285 = pneg %p158
        $region22: #{tpu_custom_call.1} parent=11 // pred_check_branch
          %287 = sbr.rel (%p285) target = $region24
        $region23: #{tpu_custom_call.1} parent=11 // pred_region
          %289 = vsyncadd [#allocation9], 0
          %s290 = sshll.u32 %s4, 4
          %s291 = int_to_ptr.hbm [resolvable:$true] %s290
          %s292 = sshll.u32 [#allocation10], 4
          %s293 = int_to_ptr.vmem [resolvable:$true] %s292
          %298 = dma.hbm_to_vmem [thread:$0]  %s291, 2048, %s293, [#allocation9], 128, 128, 8
        $region24: #{tpu_custom_call.1} parent=11 // pred_fallthru
          _
      $region12: #{tpu_custom_call.1} parent=5 // pred_fallthru
        _
      %p299 = scmp.lt.s32.totalorder %s27, 2
      // Predicated region
      $region25: #{tpu_custom_call.1} parent=5 // pred_check
        %p300 = pneg %p299
      $region26: #{tpu_custom_call.1} parent=5 // pred_check_branch
        %302 = sbr.rel (%p300) target = $region28
      $region27: #{tpu_custom_call.1} parent=5 // pred_region
        // Predicated region
        $region29: #{tpu_custom_call.1} parent=27 // pred_check
          %p303 = pneg %p61
        $region30: #{tpu_custom_call.1} parent=27 // pred_check_branch
          %305 = sbr.rel (%p303) target = $region32
        $region31: #{tpu_custom_call.1} parent=27 // pred_region
          %s306 = sand.u32 %s51, 1
          %s307 = scalar_lea.sflag [#allocation3], %s306
          %s308 = sand.u32 %s51, 1
          %s309 = smul.addr %s308, 256
          %s310 = scalar_lea.vmem [#allocation2], %s309
          %s311 = smul.u32 32, %s35
          %313 = vsyncadd %s307, 0
          %s314 = smul.addr %s34, 32
          %s315 = sadd.s32 %s311, %s314
          %s316 = smul.addr %s315, 8
          %s317 = scalar_lea.hbm %s0, %s316
          %s318 = sshll.u32 %s317, 4
          %s319 = int_to_ptr.hbm [resolvable:$true] %s318
          %s320 = sshll.u32 %s310, 4
          %s321 = int_to_ptr.vmem [resolvable:$true] %s320
          %326 = dma.hbm_to_vmem [thread:$0]  %s319, 4096, %s321, %s307, 128, 128, 8
        $region32: #{tpu_custom_call.1} parent=27 // pred_fallthru
          _
        // Predicated region
        $region33: #{tpu_custom_call.1} parent=27 // pred_check
          %p327 = pneg %p89
        $region34: #{tpu_custom_call.1} parent=27 // pred_check_branch
          %329 = sbr.rel (%p327) target = $region36
        $region35: #{tpu_custom_call.1} parent=27 // pred_region
          %s330 = sand.u32 %s27, 1
          %s331 = scalar_lea.sflag [#allocation6], %s330
          %s332 = sand.u32 %s79, 1
          %s333 = smul.addr %s332, 256
          %s334 = scalar_lea.vmem [#allocation5], %s333
          %s335 = smul.u32 32, %s35
          %337 = vsyncadd %s331, 0
          %s338 = smul.addr %s34, 32
          %s339 = sadd.s32 %s335, %s338
          %s340 = smul.addr %s339, 8
          %s341 = scalar_lea.hbm %s1, %s340
          %s342 = sshll.u32 %s341, 4
          %s343 = int_to_ptr.hbm [resolvable:$true] %s342
          %s344 = sshll.u32 %s334, 4
          %s345 = int_to_ptr.vmem [resolvable:$true] %s344
          %350 = dma.hbm_to_vmem [thread:$0]  %s343, 4096, %s345, %s331, 128, 128, 8
        $region36: #{tpu_custom_call.1} parent=27 // pred_fallthru
          _
      $region28: #{tpu_custom_call.1} parent=5 // pred_fallthru
        _
      %p351 = scmp.le.s32.totalorder 1, %s27
      %p352 = scmp.lt.s32.totalorder %s27, 3
      %p353 = pnand %p351, %p352
      %p354 = pneg %p353
      // Predicated region
      $region37: #{tpu_custom_call.1} parent=5 // pred_check
        _
      $region38: #{tpu_custom_call.1} parent=5 // pred_check_branch
        %356 = sbr.rel (%p353) target = $region40
      $region39: #{tpu_custom_call.1} parent=5 // pred_region
        %s357 = ssub.s32 %s27, 1
        %s358 = sand.u32 %s54, 1
        %s359 = scalar_lea.sflag [#allocation3], %s358
        %s360 = sand.u32 %s54, 1
        %s361 = smul.addr %s360, 256
        %s362 = scalar_lea.vmem [#allocation2], %s361
        // Predicated region
        $region41: #{tpu_custom_call.1} parent=39 // pred_check
          %p363 = pneg %p67
        $region42: #{tpu_custom_call.1} parent=39 // pred_check_branch
          %365 = sbr.rel (%p363) target = $region44
        $region43: #{tpu_custom_call.1} parent=39 // pred_region
          %367 = dma.done %s359, 4096
        $region44: #{tpu_custom_call.1} parent=39 // pred_fallthru
          _
        %s368 = sand.u32 %s32, 1
        %s369 = scalar_lea.sflag [#allocation6], %s368
        %s370 = sand.u32 %s82, 1
        %s371 = smul.addr %s370, 256
        %s372 = scalar_lea.vmem [#allocation5], %s371
        // Predicated region
        $region45: #{tpu_custom_call.1} parent=39 // pred_check
          %p373 = pneg %p95
        $region46: #{tpu_custom_call.1} parent=39 // pred_check_branch
          %375 = sbr.rel (%p373) target = $region48
        $region47: #{tpu_custom_call.1} parent=39 // pred_region
          %377 = dma.done %s369, 4096
        $region48: #{tpu_custom_call.1} parent=39 // pred_fallthru
          _
        // Predicated region
        $region49: #{tpu_custom_call.1} parent=39 // pred_check
          %p378 = pneg %p116
        $region50: #{tpu_custom_call.1} parent=39 // pred_check_branch
          %380 = sbr.rel (%p378) target = $region52
        $region51: #{tpu_custom_call.1} parent=39 // pred_region
          %382 = dma.done [#allocation6], 2048
        $region52: #{tpu_custom_call.1} parent=39 // pred_fallthru
          _
        // Predicated region
        $region53: #{tpu_custom_call.1} parent=39 // pred_check
          %p383 = pneg %p137
        $region54: #{tpu_custom_call.1} parent=39 // pred_check_branch
          %385 = sbr.rel (%p383) target = $region56
        $region55: #{tpu_custom_call.1} parent=39 // pred_region
          %387 = dma.done [#allocation9], 2048
        $region56: #{tpu_custom_call.1} parent=39 // pred_fallthru
          _
        // Predicated region
        $region57: #{tpu_custom_call.1} parent=39 // pred_check
          %p388 = pneg %p158
        $region58: #{tpu_custom_call.1} parent=39 // pred_check_branch
          %390 = sbr.rel (%p388) target = $region60
        $region59: #{tpu_custom_call.1} parent=39 // pred_region
          %392 = dma.done [#allocation9], 2048
        $region60: #{tpu_custom_call.1} parent=39 // pred_fallthru
          _
        %s393 = sand.u32 %s54, 1
        %s394 = scalar_lea.sflag [#allocation3], %s393
        %s395 = sand.u32 %s54, 1
        %s396 = smul.addr %s395, 256
        %s397 = scalar_lea.vmem [#allocation2], %s396
        %p398 = pneg %p67
        %p399 = pneg %p64
        %s400 = sand.u32 %s32, 1
        %s401 = scalar_lea.sflag [#allocation6], %s400
        %s402 = sand.u32 %s82, 1
        %s403 = smul.addr %s402, 256
        %s404 = scalar_lea.vmem [#allocation5], %s403
        %p405 = pneg %p95
        %p406 = pneg %p92
        %p407 = pneg %p116
        %p408 = pneg %p113
        %p409 = pneg %p137
        %p410 = pneg %p134
        %p411 = pneg %p158
        %p412 = pneg %p155
        %p413 = pneg %p186
        %p414 = pneg %p183
        %s415 = sand.u32 %s173, 1
        %s416 = scalar_lea.sflag [#allocation4], %s415
        %s417 = sand.u32 %s173, 1
        %s418 = smul.addr %s417, 256
        %s419 = scalar_lea.vmem [#allocation11], %s418
        %p420 = pneg %p214
        %p421 = pneg %p211
        %s422 = sand.u32 %s32, 1
        %s423 = scalar_lea.sflag [#allocation13], %s422
        %s424 = sand.u32 %s201, 1
        %s425 = smul.addr %s424, 256
        %s426 = scalar_lea.vmem [#allocation12], %s425
        %p427 = pneg %p242
        %p428 = pneg %p239
        %s429 = sand.u32 %s32, 1
        %s430 = scalar_lea.sflag [#allocation13], %s429
        %s431 = sand.u32 %s229, 1
        %s432 = smul.addr %s431, 256
        %s433 = scalar_lea.vmem [#allocation14], %s432
        %s434 = smul.u32 32, %s37
        %s435 = smul.u32 32, %s37
        %s436 = smul.u32 32, %s37
        %s437 = smul.u32 32, %s37
        %s438 = smul.u32 32, %s37
        %v439 = vld [vmem:[%s362] sm:$0xff]
        %v440 = vld [vmem:[%s362 + $0x8] sm:$0xff]
        %v441 = vld [vmem:[%s362 + $0x10] sm:$0xff]
        %v442 = vld [vmem:[%s362 + $0x18] sm:$0xff]
        %v443 = vld [vmem:[%s362 + $0x20] sm:$0xff]
        %v444 = vld [vmem:[%s362 + $0x28] sm:$0xff]
        %v445 = vld [vmem:[%s362 + $0x30] sm:$0xff]
        %v446 = vld [vmem:[%s362 + $0x38] sm:$0xff]
        %v447 = vld [vmem:[%s362 + $0x40] sm:$0xff]
        %v448 = vld [vmem:[%s362 + $0x48] sm:$0xff]
        %v449 = vld [vmem:[%s362 + $0x50] sm:$0xff]
        %v450 = vld [vmem:[%s362 + $0x58] sm:$0xff]
        %v451 = vld [vmem:[%s362 + $0x60] sm:$0xff]
        %v452 = vld [vmem:[%s362 + $0x68] sm:$0xff]
        %v453 = vld [vmem:[%s362 + $0x70] sm:$0xff]
        %v454 = vld [vmem:[%s362 + $0x78] sm:$0xff]
        %v455 = vld [vmem:[%s362 + $0x80] sm:$0xff]
        %v456 = vld [vmem:[%s362 + $0x88] sm:$0xff]
        %v457 = vld [vmem:[%s362 + $0x90] sm:$0xff]
        %v458 = vld [vmem:[%s362 + $0x98] sm:$0xff]
        %v459 = vld [vmem:[%s362 + $0xa0] sm:$0xff]
        %v460 = vld [vmem:[%s362 + $0xa8] sm:$0xff]
        %v461 = vld [vmem:[%s362 + $0xb0] sm:$0xff]
        %v462 = vld [vmem:[%s362 + $0xb8] sm:$0xff]
        %v463 = vld [vmem:[%s362 + $0xc0] sm:$0xff]
        %v464 = vld [vmem:[%s362 + $0xc8] sm:$0xff]
        %v465 = vld [vmem:[%s362 + $0xd0] sm:$0xff]
        %v466 = vld [vmem:[%s362 + $0xd8] sm:$0xff]
        %v467 = vld [vmem:[%s362 + $0xe0] sm:$0xff]
        %v468 = vld [vmem:[%s362 + $0xe8] sm:$0xff]
        %v469 = vld [vmem:[%s362 + $0xf0] sm:$0xff]
        %v470 = vld [vmem:[%s362 + $0xf8] sm:$0xff]
        %v471 = vld [vmem:[%s372] sm:$0xff]
        %v472 = vld [vmem:[%s372 + $0x8] sm:$0xff]
        %v473 = vld [vmem:[%s372 + $0x10] sm:$0xff]
        %v474 = vld [vmem:[%s372 + $0x18] sm:$0xff]
        %v475 = vld [vmem:[%s372 + $0x20] sm:$0xff]
        %v476 = vld [vmem:[%s372 + $0x28] sm:$0xff]
        %v477 = vld [vmem:[%s372 + $0x30] sm:$0xff]
        %v478 = vld [vmem:[%s372 + $0x38] sm:$0xff]
        %v479 = vld [vmem:[%s372 + $0x40] sm:$0xff]
        %v480 = vld [vmem:[%s372 + $0x48] sm:$0xff]
        %v481 = vld [vmem:[%s372 + $0x50] sm:$0xff]
        %v482 = vld [vmem:[%s372 + $0x58] sm:$0xff]
        %v483 = vld [vmem:[%s372 + $0x60] sm:$0xff]
        %v484 = vld [vmem:[%s372 + $0x68] sm:$0xff]
        %v485 = vld [vmem:[%s372 + $0x70] sm:$0xff]
        %v486 = vld [vmem:[%s372 + $0x78] sm:$0xff]
        %v487 = vld [vmem:[%s372 + $0x80] sm:$0xff]
        %v488 = vld [vmem:[%s372 + $0x88] sm:$0xff]
        %v489 = vld [vmem:[%s372 + $0x90] sm:$0xff]
        %v490 = vld [vmem:[%s372 + $0x98] sm:$0xff]
        %v491 = vld [vmem:[%s372 + $0xa0] sm:$0xff]
        %v492 = vld [vmem:[%s372 + $0xa8] sm:$0xff]
        %v493 = vld [vmem:[%s372 + $0xb0] sm:$0xff]
        %v494 = vld [vmem:[%s372 + $0xb8] sm:$0xff]
        %v495 = vld [vmem:[%s372 + $0xc0] sm:$0xff]
        %v496 = vld [vmem:[%s372 + $0xc8] sm:$0xff]
        %v497 = vld [vmem:[%s372 + $0xd0] sm:$0xff]
        %v498 = vld [vmem:[%s372 + $0xd8] sm:$0xff]
        %v499 = vld [vmem:[%s372 + $0xe0] sm:$0xff]
        %v500 = vld [vmem:[%s372 + $0xe8] sm:$0xff]
        %v501 = vld [vmem:[%s372 + $0xf0] sm:$0xff]
        %v502 = vld [vmem:[%s372 + $0xf8] sm:$0xff]
        %v503 = vld [vmem:[#allocation7] sm:$0xff]
        %v504 = vld [vmem:[#allocation7 + $0x8] sm:$0xff]
        %v505 = vld [vmem:[#allocation7 + $0x10] sm:$0xff]
        %v506 = vld [vmem:[#allocation7 + $0x18] sm:$0xff]
        %v507 = vld [vmem:[#allocation7 + $0x20] sm:$0xff]
        %v508 = vld [vmem:[#allocation7 + $0x28] sm:$0xff]
        %v509 = vld [vmem:[#allocation7 + $0x30] sm:$0xff]
        %v510 = vld [vmem:[#allocation7 + $0x38] sm:$0xff]
        %v511 = vld [vmem:[#allocation7 + $0x40] sm:$0xff]
        %v512 = vld [vmem:[#allocation7 + $0x48] sm:$0xff]
        %v513 = vld [vmem:[#allocation7 + $0x50] sm:$0xff]
        %v514 = vld [vmem:[#allocation7 + $0x58] sm:$0xff]
        %v515 = vld [vmem:[#allocation7 + $0x60] sm:$0xff]
        %v516 = vld [vmem:[#allocation7 + $0x68] sm:$0xff]
        %v517 = vld [vmem:[#allocation7 + $0x70] sm:$0xff]
        %v518 = vld [vmem:[#allocation7 + $0x78] sm:$0xff]
        %519 = vmatpush.msra.mxu0 %v518
        %520 = vmatpush.msra.mxu0 %v517
        %521 = vmatpush.msra.mxu0 %v516
        %522 = vmatpush.msra.mxu0 %v515
        %523 = vmatpush.msra.mxu0 %v514
        %524 = vmatpush.msra.mxu0 %v513
        %525 = vmatpush.msra.mxu0 %v512
        %526 = vmatpush.msra.mxu0 %v511
        %527 = vmatpush.msra.mxu0 %v510
        %528 = vmatpush.msra.mxu0 %v509
        %529 = vmatpush.msra.mxu0 %v508
        %530 = vmatpush.msra.mxu0 %v507
        %531 = vmatpush.msra.mxu0 %v506
        %532 = vmatpush.msra.mxu0 %v505
        %533 = vmatpush.msra.mxu0 %v504
        %534 = vmatpush.msra.mxu0 %v503
        %535 = vmatmul.f32.gmra.mxu0 %v439
        %v536 = vpop.f32.mrf.mxu0
        %v537 = vadd.f32 0.0, %v536
        %538 = vmatmul.f32.gmra.mxu0 %v440
        %v539 = vpop.f32.mrf.mxu0
        %v540 = vadd.f32 0.0, %v539
        %541 = vmatmul.f32.gmra.mxu0 %v441
        %v542 = vpop.f32.mrf.mxu0
        %v543 = vadd.f32 0.0, %v542
        %544 = vmatmul.f32.gmra.mxu0 %v442
        %v545 = vpop.f32.mrf.mxu0
        %v546 = vadd.f32 0.0, %v545
        %547 = vmatmul.f32.gmra.mxu0 %v443
        %v548 = vpop.f32.mrf.mxu0
        %v549 = vadd.f32 0.0, %v548
        %550 = vmatmul.f32.gmra.mxu0 %v444
        %v551 = vpop.f32.mrf.mxu0
        %v552 = vadd.f32 0.0, %v551
        %553 = vmatmul.f32.gmra.mxu0 %v445
        %v554 = vpop.f32.mrf.mxu0
        %v555 = vadd.f32 0.0, %v554
        %556 = vmatmul.f32.gmra.mxu0 %v446
        %v557 = vpop.f32.mrf.mxu0
        %v558 = vadd.f32 0.0, %v557
        %559 = vmatmul.f32.gmra.mxu0 %v447
        %v560 = vpop.f32.mrf.mxu0
        %v561 = vadd.f32 0.0, %v560
        %562 = vmatmul.f32.gmra.mxu0 %v448
        %v563 = vpop.f32.mrf.mxu0
        %v564 = vadd.f32 0.0, %v563
        %565 = vmatmul.f32.gmra.mxu0 %v449
        %v566 = vpop.f32.mrf.mxu0
        %v567 = vadd.f32 0.0, %v566
        %568 = vmatmul.f32.gmra.mxu0 %v450
        %v569 = vpop.f32.mrf.mxu0
        %v570 = vadd.f32 0.0, %v569
        %571 = vmatmul.f32.gmra.mxu0 %v451
        %v572 = vpop.f32.mrf.mxu0
        %v573 = vadd.f32 0.0, %v572
        %574 = vmatmul.f32.gmra.mxu0 %v452
        %v575 = vpop.f32.mrf.mxu0
        %v576 = vadd.f32 0.0, %v575
        %577 = vmatmul.f32.gmra.mxu0 %v453
        %v578 = vpop.f32.mrf.mxu0
        %v579 = vadd.f32 0.0, %v578
        %580 = vmatmul.f32.gmra.mxu0 %v454
        %v581 = vpop.f32.mrf.mxu0
        %v582 = vadd.f32 0.0, %v581
        %583 = vmatmul.f32.gmra.mxu0 %v455
        %v584 = vpop.f32.mrf.mxu0
        %v585 = vadd.f32 0.0, %v584
        %586 = vmatmul.f32.gmra.mxu0 %v456
        %v587 = vpop.f32.mrf.mxu0
        %v588 = vadd.f32 0.0, %v587
        %589 = vmatmul.f32.gmra.mxu0 %v457
        %v590 = vpop.f32.mrf.mxu0
        %v591 = vadd.f32 0.0, %v590
        %592 = vmatmul.f32.gmra.mxu0 %v458
        %v593 = vpop.f32.mrf.mxu0
        %v594 = vadd.f32 0.0, %v593
        %595 = vmatmul.f32.gmra.mxu0 %v459
        %v596 = vpop.f32.mrf.mxu0
        %v597 = vadd.f32 0.0, %v596
        %598 = vmatmul.f32.gmra.mxu0 %v460
        %v599 = vpop.f32.mrf.mxu0
        %v600 = vadd.f32 0.0, %v599
        %601 = vmatmul.f32.gmra.mxu0 %v461
        %v602 = vpop.f32.mrf.mxu0
        %v603 = vadd.f32 0.0, %v602
        %604 = vmatmul.f32.gmra.mxu0 %v462
        %v605 = vpop.f32.mrf.mxu0
        %v606 = vadd.f32 0.0, %v605
        %607 = vmatmul.f32.gmra.mxu0 %v463
        %v608 = vpop.f32.mrf.mxu0
        %v609 = vadd.f32 0.0, %v608
        %610 = vmatmul.f32.gmra.mxu0 %v464
        %v611 = vpop.f32.mrf.mxu0
        %v612 = vadd.f32 0.0, %v611
        %613 = vmatmul.f32.gmra.mxu0 %v465
        %v614 = vpop.f32.mrf.mxu0
        %v615 = vadd.f32 0.0, %v614
        %616 = vmatmul.f32.gmra.mxu0 %v466
        %v617 = vpop.f32.mrf.mxu0
        %v618 = vadd.f32 0.0, %v617
        %619 = vmatmul.f32.gmra.mxu0 %v467
        %v620 = vpop.f32.mrf.mxu0
        %v621 = vadd.f32 0.0, %v620
        %622 = vmatmul.f32.gmra.mxu0 %v468
        %v623 = vpop.f32.mrf.mxu0
        %v624 = vadd.f32 0.0, %v623
        %625 = vmatmul.f32.gmra.mxu0 %v469
        %v626 = vpop.f32.mrf.mxu0
        %v627 = vadd.f32 0.0, %v626
        %628 = vmatmul.f32.gmra.mxu0 %v470
        %v629 = vpop.f32.mrf.mxu0
        %v630 = vadd.f32 0.0, %v629
        %631 = vdwg.mxu0
        %v632 = vld [vmem:[#allocation8] sm:$0xff]
        %v633 = vld [vmem:[#allocation8 + $0x8] sm:$0xff]
        %v634 = vld [vmem:[#allocation8 + $0x10] sm:$0xff]
        %v635 = vld [vmem:[#allocation8 + $0x18] sm:$0xff]
        %v636 = vld [vmem:[#allocation8 + $0x20] sm:$0xff]
        %v637 = vld [vmem:[#allocation8 + $0x28] sm:$0xff]
        %v638 = vld [vmem:[#allocation8 + $0x30] sm:$0xff]
        %v639 = vld [vmem:[#allocation8 + $0x38] sm:$0xff]
        %v640 = vld [vmem:[#allocation8 + $0x40] sm:$0xff]
        %v641 = vld [vmem:[#allocation8 + $0x48] sm:$0xff]
        %v642 = vld [vmem:[#allocation8 + $0x50] sm:$0xff]
        %v643 = vld [vmem:[#allocation8 + $0x58] sm:$0xff]
        %v644 = vld [vmem:[#allocation8 + $0x60] sm:$0xff]
        %v645 = vld [vmem:[#allocation8 + $0x68] sm:$0xff]
        %v646 = vld [vmem:[#allocation8 + $0x70] sm:$0xff]
        %v647 = vld [vmem:[#allocation8 + $0x78] sm:$0xff]
        %648 = vmatpush.msra.mxu0 %v647
        %649 = vmatpush.msra.mxu0 %v646
        %650 = vmatpush.msra.mxu0 %v645
        %651 = vmatpush.msra.mxu0 %v644
        %652 = vmatpush.msra.mxu0 %v643
        %653 = vmatpush.msra.mxu0 %v642
        %654 = vmatpush.msra.mxu0 %v641
        %655 = vmatpush.msra.mxu0 %v640
        %656 = vmatpush.msra.mxu0 %v639
        %657 = vmatpush.msra.mxu0 %v638
        %658 = vmatpush.msra.mxu0 %v637
        %659 = vmatpush.msra.mxu0 %v636
        %660 = vmatpush.msra.mxu0 %v635
        %661 = vmatpush.msra.mxu0 %v634
        %662 = vmatpush.msra.mxu0 %v633
        %663 = vmatpush.msra.mxu0 %v632
        %664 = vmatmul.f32.gmra.mxu0 %v471
        %v665 = vpop.f32.mrf.mxu0
        %v666 = vadd.f32 0.0, %v665
        %667 = vmatmul.f32.gmra.mxu0 %v472
        %v668 = vpop.f32.mrf.mxu0
        %v669 = vadd.f32 0.0, %v668
        %670 = vmatmul.f32.gmra.mxu0 %v473
        %v671 = vpop.f32.mrf.mxu0
        %v672 = vadd.f32 0.0, %v671
        %673 = vmatmul.f32.gmra.mxu0 %v474
        %v674 = vpop.f32.mrf.mxu0
        %v675 = vadd.f32 0.0, %v674
        %676 = vmatmul.f32.gmra.mxu0 %v475
        %v677 = vpop.f32.mrf.mxu0
        %v678 = vadd.f32 0.0, %v677
        %679 = vmatmul.f32.gmra.mxu0 %v476
        %v680 = vpop.f32.mrf.mxu0
        %v681 = vadd.f32 0.0, %v680
        %682 = vmatmul.f32.gmra.mxu0 %v477
        %v683 = vpop.f32.mrf.mxu0
        %v684 = vadd.f32 0.0, %v683
        %685 = vmatmul.f32.gmra.mxu0 %v478
        %v686 = vpop.f32.mrf.mxu0
        %v687 = vadd.f32 0.0, %v686
        %688 = vmatmul.f32.gmra.mxu0 %v479
        %v689 = vpop.f32.mrf.mxu0
        %v690 = vadd.f32 0.0, %v689
        %691 = vmatmul.f32.gmra.mxu0 %v480
        %v692 = vpop.f32.mrf.mxu0
        %v693 = vadd.f32 0.0, %v692
        %694 = vmatmul.f32.gmra.mxu0 %v481
        %v695 = vpop.f32.mrf.mxu0
        %v696 = vadd.f32 0.0, %v695
        %697 = vmatmul.f32.gmra.mxu0 %v482
        %v698 = vpop.f32.mrf.mxu0
        %v699 = vadd.f32 0.0, %v698
        %700 = vmatmul.f32.gmra.mxu0 %v483
        %v701 = vpop.f32.mrf.mxu0
        %v702 = vadd.f32 0.0, %v701
        %703 = vmatmul.f32.gmra.mxu0 %v484
        %v704 = vpop.f32.mrf.mxu0
        %v705 = vadd.f32 0.0, %v704
        %706 = vmatmul.f32.gmra.mxu0 %v485
        %v707 = vpop.f32.mrf.mxu0
        %v708 = vadd.f32 0.0, %v707
        %709 = vmatmul.f32.gmra.mxu0 %v486
        %v710 = vpop.f32.mrf.mxu0
        %v711 = vadd.f32 0.0, %v710
        %712 = vmatmul.f32.gmra.mxu0 %v487
        %v713 = vpop.f32.mrf.mxu0
        %v714 = vadd.f32 0.0, %v713
        %715 = vmatmul.f32.gmra.mxu0 %v488
        %v716 = vpop.f32.mrf.mxu0
        %v717 = vadd.f32 0.0, %v716
        %718 = vmatmul.f32.gmra.mxu0 %v489
        %v719 = vpop.f32.mrf.mxu0
        %v720 = vadd.f32 0.0, %v719
        %721 = vmatmul.f32.gmra.mxu0 %v490
        %v722 = vpop.f32.mrf.mxu0
        %v723 = vadd.f32 0.0, %v722
        %724 = vmatmul.f32.gmra.mxu0 %v491
        %v725 = vpop.f32.mrf.mxu0
        %v726 = vadd.f32 0.0, %v725
        %727 = vmatmul.f32.gmra.mxu0 %v492
        %v728 = vpop.f32.mrf.mxu0
        %v729 = vadd.f32 0.0, %v728
        %730 = vmatmul.f32.gmra.mxu0 %v493
        %v731 = vpop.f32.mrf.mxu0
        %v732 = vadd.f32 0.0, %v731
        %733 = vmatmul.f32.gmra.mxu0 %v494
        %v734 = vpop.f32.mrf.mxu0
        %v735 = vadd.f32 0.0, %v734
        %736 = vmatmul.f32.gmra.mxu0 %v495
        %v737 = vpop.f32.mrf.mxu0
        %v738 = vadd.f32 0.0, %v737
        %739 = vmatmul.f32.gmra.mxu0 %v496
        %v740 = vpop.f32.mrf.mxu0
        %v741 = vadd.f32 0.0, %v740
        %742 = vmatmul.f32.gmra.mxu0 %v497
        %v743 = vpop.f32.mrf.mxu0
        %v744 = vadd.f32 0.0, %v743
        %745 = vmatmul.f32.gmra.mxu0 %v498
        %v746 = vpop.f32.mrf.mxu0
        %v747 = vadd.f32 0.0, %v746
        %748 = vmatmul.f32.gmra.mxu0 %v499
        %v749 = vpop.f32.mrf.mxu0
        %v750 = vadd.f32 0.0, %v749
        %751 = vmatmul.f32.gmra.mxu0 %v500
        %v752 = vpop.f32.mrf.mxu0
        %v753 = vadd.f32 0.0, %v752
        %754 = vmatmul.f32.gmra.mxu0 %v501
        %v755 = vpop.f32.mrf.mxu0
        %v756 = vadd.f32 0.0, %v755
        %757 = vmatmul.f32.gmra.mxu0 %v502
        %v758 = vpop.f32.mrf.mxu0
        %v759 = vadd.f32 0.0, %v758
        %760 = vdwg.mxu0
        %v761 = vld [vmem:[#allocation10] sm:$0xff]
        %v762 = vld [vmem:[#allocation10 + $0x8] sm:$0xff]
        %v763 = vld [vmem:[#allocation10 + $0x10] sm:$0xff]
        %v764 = vld [vmem:[#allocation10 + $0x18] sm:$0xff]
        %v765 = vld [vmem:[#allocation10 + $0x20] sm:$0xff]
        %v766 = vld [vmem:[#allocation10 + $0x28] sm:$0xff]
        %v767 = vld [vmem:[#allocation10 + $0x30] sm:$0xff]
        %v768 = vld [vmem:[#allocation10 + $0x38] sm:$0xff]
        %v769 = vld [vmem:[#allocation10 + $0x40] sm:$0xff]
        %v770 = vld [vmem:[#allocation10 + $0x48] sm:$0xff]
        %v771 = vld [vmem:[#allocation10 + $0x50] sm:$0xff]
        %v772 = vld [vmem:[#allocation10 + $0x58] sm:$0xff]
        %v773 = vld [vmem:[#allocation10 + $0x60] sm:$0xff]
        %v774 = vld [vmem:[#allocation10 + $0x68] sm:$0xff]
        %v775 = vld [vmem:[#allocation10 + $0x70] sm:$0xff]
        %v776 = vld [vmem:[#allocation10 + $0x78] sm:$0xff]
        %777 = vmatpush.msra.mxu0 %v776
        %778 = vmatpush.msra.mxu0 %v775
        %779 = vmatpush.msra.mxu0 %v774
        %780 = vmatpush.msra.mxu0 %v773
        %781 = vmatpush.msra.mxu0 %v772
        %782 = vmatpush.msra.mxu0 %v771
        %783 = vmatpush.msra.mxu0 %v770
        %784 = vmatpush.msra.mxu0 %v769
        %785 = vmatpush.msra.mxu0 %v768
        %786 = vmatpush.msra.mxu0 %v767
        %787 = vmatpush.msra.mxu0 %v766
        %788 = vmatpush.msra.mxu0 %v765
        %789 = vmatpush.msra.mxu0 %v764
        %790 = vmatpush.msra.mxu0 %v763
        %791 = vmatpush.msra.mxu0 %v762
        %792 = vmatpush.msra.mxu0 %v761
        %793 = vmatmul.f32.gmra.mxu0 %v439
        %v794 = vpop.f32.mrf.mxu0
        %v795 = vadd.f32 0.0, %v794
        %796 = vmatmul.f32.gmra.mxu0 %v440
        %v797 = vpop.f32.mrf.mxu0
        %v798 = vadd.f32 0.0, %v797
        %799 = vmatmul.f32.gmra.mxu0 %v441
        %v800 = vpop.f32.mrf.mxu0
        %v801 = vadd.f32 0.0, %v800
        %802 = vmatmul.f32.gmra.mxu0 %v442
        %v803 = vpop.f32.mrf.mxu0
        %v804 = vadd.f32 0.0, %v803
        %805 = vmatmul.f32.gmra.mxu0 %v443
        %v806 = vpop.f32.mrf.mxu0
        %v807 = vadd.f32 0.0, %v806
        %808 = vmatmul.f32.gmra.mxu0 %v444
        %v809 = vpop.f32.mrf.mxu0
        %v810 = vadd.f32 0.0, %v809
        %811 = vmatmul.f32.gmra.mxu0 %v445
        %v812 = vpop.f32.mrf.mxu0
        %v813 = vadd.f32 0.0, %v812
        %814 = vmatmul.f32.gmra.mxu0 %v446
        %v815 = vpop.f32.mrf.mxu0
        %v816 = vadd.f32 0.0, %v815
        %817 = vmatmul.f32.gmra.mxu0 %v447
        %v818 = vpop.f32.mrf.mxu0
        %v819 = vadd.f32 0.0, %v818
        %820 = vmatmul.f32.gmra.mxu0 %v448
        %v821 = vpop.f32.mrf.mxu0
        %v822 = vadd.f32 0.0, %v821
        %823 = vmatmul.f32.gmra.mxu0 %v449
        %v824 = vpop.f32.mrf.mxu0
        %v825 = vadd.f32 0.0, %v824
        %826 = vmatmul.f32.gmra.mxu0 %v450
        %v827 = vpop.f32.mrf.mxu0
        %v828 = vadd.f32 0.0, %v827
        %829 = vmatmul.f32.gmra.mxu0 %v451
        %v830 = vpop.f32.mrf.mxu0
        %v831 = vadd.f32 0.0, %v830
        %832 = vmatmul.f32.gmra.mxu0 %v452
        %v833 = vpop.f32.mrf.mxu0
        %v834 = vadd.f32 0.0, %v833
        %835 = vmatmul.f32.gmra.mxu0 %v453
        %v836 = vpop.f32.mrf.mxu0
        %v837 = vadd.f32 0.0, %v836
        %838 = vmatmul.f32.gmra.mxu0 %v454
        %v839 = vpop.f32.mrf.mxu0
        %v840 = vadd.f32 0.0, %v839
        %841 = vmatmul.f32.gmra.mxu0 %v455
        %v842 = vpop.f32.mrf.mxu0
        %v843 = vadd.f32 0.0, %v842
        %844 = vmatmul.f32.gmra.mxu0 %v456
        %v845 = vpop.f32.mrf.mxu0
        %v846 = vadd.f32 0.0, %v845
        %847 = vmatmul.f32.gmra.mxu0 %v457
        %v848 = vpop.f32.mrf.mxu0
        %v849 = vadd.f32 0.0, %v848
        %850 = vmatmul.f32.gmra.mxu0 %v458
        %v851 = vpop.f32.mrf.mxu0
        %v852 = vadd.f32 0.0, %v851
        %853 = vmatmul.f32.gmra.mxu0 %v459
        %v854 = vpop.f32.mrf.mxu0
        %v855 = vadd.f32 0.0, %v854
        %856 = vmatmul.f32.gmra.mxu0 %v460
        %v857 = vpop.f32.mrf.mxu0
        %v858 = vadd.f32 0.0, %v857
        %859 = vmatmul.f32.gmra.mxu0 %v461
        %v860 = vpop.f32.mrf.mxu0
        %v861 = vadd.f32 0.0, %v860
        %862 = vmatmul.f32.gmra.mxu0 %v462
        %v863 = vpop.f32.mrf.mxu0
        %v864 = vadd.f32 0.0, %v863
        %865 = vmatmul.f32.gmra.mxu0 %v463
        %v866 = vpop.f32.mrf.mxu0
        %v867 = vadd.f32 0.0, %v866
        %868 = vmatmul.f32.gmra.mxu0 %v464
        %v869 = vpop.f32.mrf.mxu0
        %v870 = vadd.f32 0.0, %v869
        %871 = vmatmul.f32.gmra.mxu0 %v465
        %v872 = vpop.f32.mrf.mxu0
        %v873 = vadd.f32 0.0, %v872
        %874 = vmatmul.f32.gmra.mxu0 %v466
        %v875 = vpop.f32.mrf.mxu0
        %v876 = vadd.f32 0.0, %v875
        %877 = vmatmul.f32.gmra.mxu0 %v467
        %v878 = vpop.f32.mrf.mxu0
        %v879 = vadd.f32 0.0, %v878
        %880 = vmatmul.f32.gmra.mxu0 %v468
        %v881 = vpop.f32.mrf.mxu0
        %v882 = vadd.f32 0.0, %v881
        %883 = vmatmul.f32.gmra.mxu0 %v469
        %v884 = vpop.f32.mrf.mxu0
        %v885 = vadd.f32 0.0, %v884
        %886 = vmatmul.f32.gmra.mxu0 %v470
        %v887 = vpop.f32.mrf.mxu0
        %v888 = vadd.f32 0.0, %v887
        %889 = vdwg.mxu0
        %v890 = vmul.f32 %v537, 0.088388346
        %v891 = vmul.f32 %v540, 0.088388346
        %v892 = vmul.f32 %v543, 0.088388346
        %v893 = vmul.f32 %v546, 0.088388346
        %v894 = vmul.f32 %v549, 0.088388346
        %v895 = vmul.f32 %v552, 0.088388346
        %v896 = vmul.f32 %v555, 0.088388346
        %v897 = vmul.f32 %v558, 0.088388346
        %v898 = vmul.f32 %v561, 0.088388346
        %v899 = vmul.f32 %v564, 0.088388346
        %v900 = vmul.f32 %v567, 0.088388346
        %v901 = vmul.f32 %v570, 0.088388346
        %v902 = vmul.f32 %v573, 0.088388346
        %v903 = vmul.f32 %v576, 0.088388346
        %v904 = vmul.f32 %v579, 0.088388346
        %v905 = vmul.f32 %v582, 0.088388346
        %v906 = vmul.f32 %v585, 0.088388346
        %v907 = vmul.f32 %v588, 0.088388346
        %v908 = vmul.f32 %v591, 0.088388346
        %v909 = vmul.f32 %v594, 0.088388346
        %v910 = vmul.f32 %v597, 0.088388346
        %v911 = vmul.f32 %v600, 0.088388346
        %v912 = vmul.f32 %v603, 0.088388346
        %v913 = vmul.f32 %v606, 0.088388346
        %v914 = vmul.f32 %v609, 0.088388346
        %v915 = vmul.f32 %v612, 0.088388346
        %v916 = vmul.f32 %v615, 0.088388346
        %v917 = vmul.f32 %v618, 0.088388346
        %v918 = vmul.f32 %v621, 0.088388346
        %v919 = vmul.f32 %v624, 0.088388346
        %v920 = vmul.f32 %v627, 0.088388346
        %v921 = vmul.f32 %v630, 0.088388346
        %922 = vst [vmem:[%s419] sm:$0xff] %v890
        %923 = vst [vmem:[%s419 + $0x8] sm:$0xff] %v891
        %924 = vst [vmem:[%s419 + $0x10] sm:$0xff] %v892
        %925 = vst [vmem:[%s419 + $0x18] sm:$0xff] %v893
        %926 = vst [vmem:[%s419 + $0x20] sm:$0xff] %v894
        %927 = vst [vmem:[%s419 + $0x28] sm:$0xff] %v895
        %928 = vst [vmem:[%s419 + $0x30] sm:$0xff] %v896
        %929 = vst [vmem:[%s419 + $0x38] sm:$0xff] %v897
        %930 = vst [vmem:[%s419 + $0x40] sm:$0xff] %v898
        %931 = vst [vmem:[%s419 + $0x48] sm:$0xff] %v899
        %932 = vst [vmem:[%s419 + $0x50] sm:$0xff] %v900
        %933 = vst [vmem:[%s419 + $0x58] sm:$0xff] %v901
        %934 = vst [vmem:[%s419 + $0x60] sm:$0xff] %v902
        %935 = vst [vmem:[%s419 + $0x68] sm:$0xff] %v903
        %936 = vst [vmem:[%s419 + $0x70] sm:$0xff] %v904
        %937 = vst [vmem:[%s419 + $0x78] sm:$0xff] %v905
        %938 = vst [vmem:[%s419 + $0x80] sm:$0xff] %v906
        %939 = vst [vmem:[%s419 + $0x88] sm:$0xff] %v907
        %940 = vst [vmem:[%s419 + $0x90] sm:$0xff] %v908
        %941 = vst [vmem:[%s419 + $0x98] sm:$0xff] %v909
        %942 = vst [vmem:[%s419 + $0xa0] sm:$0xff] %v910
        %943 = vst [vmem:[%s419 + $0xa8] sm:$0xff] %v911
        %944 = vst [vmem:[%s419 + $0xb0] sm:$0xff] %v912
        %945 = vst [vmem:[%s419 + $0xb8] sm:$0xff] %v913
        %946 = vst [vmem:[%s419 + $0xc0] sm:$0xff] %v914
        %947 = vst [vmem:[%s419 + $0xc8] sm:$0xff] %v915
        %948 = vst [vmem:[%s419 + $0xd0] sm:$0xff] %v916
        %949 = vst [vmem:[%s419 + $0xd8] sm:$0xff] %v917
        %950 = vst [vmem:[%s419 + $0xe0] sm:$0xff] %v918
        %951 = vst [vmem:[%s419 + $0xe8] sm:$0xff] %v919
        %952 = vst [vmem:[%s419 + $0xf0] sm:$0xff] %v920
        %953 = vst [vmem:[%s419 + $0xf8] sm:$0xff] %v921
        %954 = vst [vmem:[%s426] sm:$0xff] %v666
        %955 = vst [vmem:[%s426 + $0x8] sm:$0xff] %v669
        %956 = vst [vmem:[%s426 + $0x10] sm:$0xff] %v672
        %957 = vst [vmem:[%s426 + $0x18] sm:$0xff] %v675
        %958 = vst [vmem:[%s426 + $0x20] sm:$0xff] %v678
        %959 = vst [vmem:[%s426 + $0x28] sm:$0xff] %v681
        %960 = vst [vmem:[%s426 + $0x30] sm:$0xff] %v684
        %961 = vst [vmem:[%s426 + $0x38] sm:$0xff] %v687
        %962 = vst [vmem:[%s426 + $0x40] sm:$0xff] %v690
        %963 = vst [vmem:[%s426 + $0x48] sm:$0xff] %v693
        %964 = vst [vmem:[%s426 + $0x50] sm:$0xff] %v696
        %965 = vst [vmem:[%s426 + $0x58] sm:$0xff] %v699
        %966 = vst [vmem:[%s426 + $0x60] sm:$0xff] %v702
        %967 = vst [vmem:[%s426 + $0x68] sm:$0xff] %v705
        %968 = vst [vmem:[%s426 + $0x70] sm:$0xff] %v708
        %969 = vst [vmem:[%s426 + $0x78] sm:$0xff] %v711
        %970 = vst [vmem:[%s426 + $0x80] sm:$0xff] %v714
        %971 = vst [vmem:[%s426 + $0x88] sm:$0xff] %v717
        %972 = vst [vmem:[%s426 + $0x90] sm:$0xff] %v720
        %973 = vst [vmem:[%s426 + $0x98] sm:$0xff] %v723
        %974 = vst [vmem:[%s426 + $0xa0] sm:$0xff] %v726
        %975 = vst [vmem:[%s426 + $0xa8] sm:$0xff] %v729
        %976 = vst [vmem:[%s426 + $0xb0] sm:$0xff] %v732
        %977 = vst [vmem:[%s426 + $0xb8] sm:$0xff] %v735
        %978 = vst [vmem:[%s426 + $0xc0] sm:$0xff] %v738
        %979 = vst [vmem:[%s426 + $0xc8] sm:$0xff] %v741
        %980 = vst [vmem:[%s426 + $0xd0] sm:$0xff] %v744
        %981 = vst [vmem:[%s426 + $0xd8] sm:$0xff] %v747
        %982 = vst [vmem:[%s426 + $0xe0] sm:$0xff] %v750
        %983 = vst [vmem:[%s426 + $0xe8] sm:$0xff] %v753
        %984 = vst [vmem:[%s426 + $0xf0] sm:$0xff] %v756
        %985 = vst [vmem:[%s426 + $0xf8] sm:$0xff] %v759
        %986 = vst [vmem:[%s433] sm:$0xff] %v795
        %987 = vst [vmem:[%s433 + $0x8] sm:$0xff] %v798
        %988 = vst [vmem:[%s433 + $0x10] sm:$0xff] %v801
        %989 = vst [vmem:[%s433 + $0x18] sm:$0xff] %v804
        %990 = vst [vmem:[%s433 + $0x20] sm:$0xff] %v807
        %991 = vst [vmem:[%s433 + $0x28] sm:$0xff] %v810
        %992 = vst [vmem:[%s433 + $0x30] sm:$0xff] %v813
        %993 = vst [vmem:[%s433 + $0x38] sm:$0xff] %v816
        %994 = vst [vmem:[%s433 + $0x40] sm:$0xff] %v819
        %995 = vst [vmem:[%s433 + $0x48] sm:$0xff] %v822
        %996 = vst [vmem:[%s433 + $0x50] sm:$0xff] %v825
        %997 = vst [vmem:[%s433 + $0x58] sm:$0xff] %v828
        %998 = vst [vmem:[%s433 + $0x60] sm:$0xff] %v831
        %999 = vst [vmem:[%s433 + $0x68] sm:$0xff] %v834
        %1000 = vst [vmem:[%s433 + $0x70] sm:$0xff] %v837
        %1001 = vst [vmem:[%s433 + $0x78] sm:$0xff] %v840
        %1002 = vst [vmem:[%s433 + $0x80] sm:$0xff] %v843
        %1003 = vst [vmem:[%s433 + $0x88] sm:$0xff] %v846
        %1004 = vst [vmem:[%s433 + $0x90] sm:$0xff] %v849
        %1005 = vst [vmem:[%s433 + $0x98] sm:$0xff] %v852
        %1006 = vst [vmem:[%s433 + $0xa0] sm:$0xff] %v855
        %1007 = vst [vmem:[%s433 + $0xa8] sm:$0xff] %v858
        %1008 = vst [vmem:[%s433 + $0xb0] sm:$0xff] %v861
        %1009 = vst [vmem:[%s433 + $0xb8] sm:$0xff] %v864
        %1010 = vst [vmem:[%s433 + $0xc0] sm:$0xff] %v867
        %1011 = vst [vmem:[%s433 + $0xc8] sm:$0xff] %v870
        %1012 = vst [vmem:[%s433 + $0xd0] sm:$0xff] %v873
        %1013 = vst [vmem:[%s433 + $0xd8] sm:$0xff] %v876
        %1014 = vst [vmem:[%s433 + $0xe0] sm:$0xff] %v879
        %1015 = vst [vmem:[%s433 + $0xe8] sm:$0xff] %v882
        %1016 = vst [vmem:[%s433 + $0xf0] sm:$0xff] %v885
        %1017 = vst [vmem:[%s433 + $0xf8] sm:$0xff] %v888
        %s1018 = sand.u32 %s173, 1
        %s1019 = scalar_lea.sflag [#allocation4], %s1018
        %s1020 = sand.u32 %s173, 1
        %s1021 = smul.addr %s1020, 256
        %s1022 = scalar_lea.vmem [#allocation11], %s1021
        %s1023 = sand.u32 %s32, 1
        %s1024 = scalar_lea.sflag [#allocation13], %s1023
        %s1025 = sand.u32 %s201, 1
        %s1026 = smul.addr %s1025, 256
        %s1027 = scalar_lea.vmem [#allocation12], %s1026
        %s1028 = sand.u32 %s32, 1
        %s1029 = scalar_lea.sflag [#allocation13], %s1028
        %s1030 = sand.u32 %s229, 1
        %s1031 = smul.addr %s1030, 256
        %s1032 = scalar_lea.vmem [#allocation14], %s1031
        // Predicated region
        $region61: #{tpu_custom_call.1} parent=39 // pred_check
          %p1033 = pneg %p183
        $region62: #{tpu_custom_call.1} parent=39 // pred_check_branch
          %1035 = sbr.rel (%p1033) target = $region64
        $region63: #{tpu_custom_call.1} parent=39 // pred_region
          %s1036 = smul.u32 32, %s37
          %1038 = vsyncadd %s1019, 0
          %s1039 = smul.addr %s36, 32
          %s1040 = sadd.s32 %s1036, %s1039
          %s1041 = smul.addr %s1040, 8
          %s1042 = scalar_lea.hbm %s5, %s1041
          %s1043 = sshll.u32 %s1022, 4
          %s1044 = int_to_ptr.vmem [resolvable:$true] %s1043
          %s1045 = sshll.u32 %s1042, 4
          %s1046 = int_to_ptr.hbm [resolvable:$true] %s1045
          %1051 = dma.vmem_to_hbm [thread:$0]  %s1044, 4096, %s1046, %s1019, 128, 128, 8
        $region64: #{tpu_custom_call.1} parent=39 // pred_fallthru
          _
        // Predicated region
        $region65: #{tpu_custom_call.1} parent=39 // pred_check
          %p1052 = pneg %p211
        $region66: #{tpu_custom_call.1} parent=39 // pred_check_branch
          %1054 = sbr.rel (%p1052) target = $region68
        $region67: #{tpu_custom_call.1} parent=39 // pred_region
          %s1055 = smul.u32 32, %s37
          %1057 = vsyncadd %s1024, 0
          %s1058 = smul.addr %s36, 32
          %s1059 = sadd.s32 %s1055, %s1058
          %s1060 = smul.addr %s1059, 8
          %s1061 = scalar_lea.hbm %s6, %s1060
          %s1062 = sshll.u32 %s1027, 4
          %s1063 = int_to_ptr.vmem [resolvable:$true] %s1062
          %s1064 = sshll.u32 %s1061, 4
          %s1065 = int_to_ptr.hbm [resolvable:$true] %s1064
          %1070 = dma.vmem_to_hbm [thread:$0]  %s1063, 4096, %s1065, %s1024, 128, 128, 8
        $region68: #{tpu_custom_call.1} parent=39 // pred_fallthru
          _
        // Predicated region
        $region69: #{tpu_custom_call.1} parent=39 // pred_check
          %p1071 = pneg %p239
        $region70: #{tpu_custom_call.1} parent=39 // pred_check_branch
          %1073 = sbr.rel (%p1071) target = $region72
        $region71: #{tpu_custom_call.1} parent=39 // pred_region
          %s1074 = smul.u32 32, %s37
          %1076 = vsyncadd %s1029, 0
          %s1077 = smul.addr %s36, 32
          %s1078 = sadd.s32 %s1074, %s1077
          %s1079 = smul.addr %s1078, 8
          %s1080 = scalar_lea.hbm %s7, %s1079
          %s1081 = sshll.u32 %s1032, 4
          %s1082 = int_to_ptr.vmem [resolvable:$true] %s1081
          %s1083 = sshll.u32 %s1080, 4
          %s1084 = int_to_ptr.hbm [resolvable:$true] %s1083
          %1089 = dma.vmem_to_hbm [thread:$0]  %s1082, 4096, %s1084, %s1029, 128, 128, 8
        $region72: #{tpu_custom_call.1} parent=39 // pred_fallthru
          _
      $region40: #{tpu_custom_call.1} parent=5 // pred_fallthru
        _
      %p1090 = scmp.le.s32.totalorder 2, %s27
      // Predicated region
      $region73: #{tpu_custom_call.1} parent=5 // pred_check
        %p1091 = pneg %p1090
      $region74: #{tpu_custom_call.1} parent=5 // pred_check_branch
        %1093 = sbr.rel (%p1091) target = $region76
      $region75: #{tpu_custom_call.1} parent=5 // pred_region
        %s1094 = ssub.s32 %s27, 2
        // Predicated region
        $region77: #{tpu_custom_call.1} parent=75 // pred_check
          %p1095 = pneg %p189
        $region78: #{tpu_custom_call.1} parent=75 // pred_check_branch
          %1097 = sbr.rel (%p1095) target = $region80
        $region79: #{tpu_custom_call.1} parent=75 // pred_region
          %s1098 = sand.u32 %s174, 1
          %s1099 = scalar_lea.sflag [#allocation4], %s1098
          %s1100 = sand.u32 %s174, 1
          %s1101 = smul.addr %s1100, 256
          %s1102 = scalar_lea.vmem [#allocation11], %s1101
          %1104 = dma.done %s1099, 4096
        $region80: #{tpu_custom_call.1} parent=75 // pred_fallthru
          _
        // Predicated region
        $region81: #{tpu_custom_call.1} parent=75 // pred_check
          %p1105 = pneg %p217
        $region82: #{tpu_custom_call.1} parent=75 // pred_check_branch
          %1107 = sbr.rel (%p1105) target = $region84
        $region83: #{tpu_custom_call.1} parent=75 // pred_region
          %s1108 = sand.u32 %s33, 1
          %s1109 = scalar_lea.sflag [#allocation13], %s1108
          %s1110 = sand.u32 %s202, 1
          %s1111 = smul.addr %s1110, 256
          %s1112 = scalar_lea.vmem [#allocation12], %s1111
          %1114 = dma.done %s1109, 4096
        $region84: #{tpu_custom_call.1} parent=75 // pred_fallthru
          _
        // Predicated region
        $region85: #{tpu_custom_call.1} parent=75 // pred_check
          %p1115 = pneg %p245
        $region86: #{tpu_custom_call.1} parent=75 // pred_check_branch
          %1117 = sbr.rel (%p1115) target = $region88
        $region87: #{tpu_custom_call.1} parent=75 // pred_region
          %s1118 = sand.u32 %s33, 1
          %s1119 = scalar_lea.sflag [#allocation13], %s1118
          %s1120 = sand.u32 %s230, 1
          %s1121 = smul.addr %s1120, 256
          %s1122 = scalar_lea.vmem [#allocation14], %s1121
          %1124 = dma.done %s1119, 4096
        $region88: #{tpu_custom_call.1} parent=75 // pred_fallthru
          _
      $region76: #{tpu_custom_call.1} parent=5 // pred_fallthru
        _
    $region6: #{tpu_custom_call.1} parent=1 // loop_footer
      %s31 = sadd.s32 1, %s27
    $region7: #{tpu_custom_call.1} parent=1 // loop_footer_branch
      %26 = sbr.rel target = $region3
    $region8: #{tpu_custom_call.1} parent=1 // loop_exit
      _
    %1125 = vsyncpa [#allocation3], 1
    %s1126 = scalar_lea.sflag [#allocation3], 1
    %1127 = vsyncpa %s1126, 1
    %1128 = vsyncpa [#allocation6], 1
    %s1129 = scalar_lea.sflag [#allocation6], 1
    %1130 = vsyncpa %s1129, 1
    %1131 = vsyncpa [#allocation9], 1
    %1132 = vsyncpa [#allocation4], 1
    %s1133 = scalar_lea.sflag [#allocation4], 1
    %1134 = vsyncpa %s1133, 1
    %1135 = vsyncpa [#allocation13], 1
    %s1136 = scalar_lea.sflag [#allocation13], 1
    %1137 = vsyncpa %s1136, 1

</llo_original>
